<compile_context>
chip_gen: v7x
topology: tpu7x:2x2x1
jax: 0.10.0
libtpu: 0.0.40
codegen_flags: <defaults>
</compile_context>

<pallas_src>
import functools
import math

import jax
import jax.numpy as jnp
from jax.experimental import pallas as pl
from jax.experimental.pallas import tpu as pltpu


def _arcface_kernel(emb_ref, w_ref, lab_ref, out_ref, *,
                    s, s_cos_m, s_sin_m, emb_resident):
    # emb_ref: (B, D) or (tm, D) operand dtype; w_ref: (tn, D) operand dtype,
    #   rows already L2-normalized in the wrapper; lab_ref: (B, 1) or (tm, 1)
    #   int32; out_ref: (tm, tn) out dtype.
    j = pl.program_id(0)                       # class-tile index (outer axis)
    tm, tn = out_ref.shape

    if emb_resident:
        # Whole batch lives in VMEM (DMA'd once); slice this step's rows.
        row0 = pl.multiple_of(pl.program_id(1) * tm, tm)
        emb = emb_ref[pl.ds(row0, tm), :]
        lab = lab_ref[pl.ds(row0, tm), :]
    else:
        emb = emb_ref[...]
        lab = lab_ref[...]

    # MXU: cos_theta = emb @ W_tile.T with f32 accumulation (W pre-normalized).
    cos_theta = jax.lax.dot_general(
        emb, w_ref[...],
        dimension_numbers=(((1,), (1,)), ((), ())),
        preferred_element_type=jnp.float32,
    )                                                          # (tm, tn)
    cos_theta = jnp.clip(cos_theta, -1.0, 1.0)
    sin_theta = jnp.sqrt(jnp.maximum(1.0 - cos_theta * cos_theta, 0.0))

    # scale folded into the trig constants.
    cos_scaled = cos_theta * s
    tgt_scaled = cos_theta * s_cos_m - sin_theta * s_sin_m     # scale*cos(th+m)

    # One-hot blend mask from integer label ids: the tile offset j*tn is applied
    # on the cheap (tm, 1) side, not on the full (tm, tn) iota.
    col = jax.lax.broadcasted_iota(jnp.int32, (tm, tn), 1)
    is_target = col == (lab - j * tn)
    out_ref[...] = jnp.where(is_target, tgt_scaled, cos_scaled).astype(out_ref.dtype)


def arcface_loss_forward(embeddings, weight, label_ids, *, margin=0.5, scale=30.0,
                         tm=256, tn=2048, use_bf16_matmul=True,
                         out_dtype=jnp.float32, emb_resident=None,
                         vmem_budget_bytes=20 * 1024 * 1024):
    """Pallas TPU implementation of ArcFaceLoss.forward.

    embeddings: (B, 512) float32
    weight:     (num_classes, 512) float32 (un-normalized parameter)
    label_ids:  (B,) int — target class index per row (hard one-hot labels)
    returns:    (B, num_classes) logits in `out_dtype`
    """
    B, D = embeddings.shape
    N, D2 = weight.shape
    assert D == D2
    assert label_ids.shape == (B,)

    op_dtype = jnp.bfloat16 if use_bf16_matmul else jnp.float32
    op_bytes = jnp.dtype(op_dtype).itemsize
    out_bytes = jnp.dtype(out_dtype).itemsize

    tm = min(tm, B)
    tn = min(tn, N)
    assert B % tm == 0 and N % tn == 0
    assert (tm % 8 == 0) or (tm == B)
    assert (tn % 128 == 0) or (tn == N)

    if emb_resident is None:
        emb_resident = (B * D * op_bytes) <= (8 * 1024 * 1024)

    # Double-buffered VMEM footprint; shrink tiles until it fits the budget
    # (conservative enough to be v7x-safe without raising vmem_limit_bytes).
    def _footprint(tm_, tn_):
        w_tile = tn_ * D * op_bytes
        o_tile = tm_ * tn_ * out_bytes
        if emb_resident:
            return 2 * (w_tile + o_tile) + (B * D * op_bytes + B * 4)
        e_tile = tm_ * D * op_bytes + tm_ * 4
        return 2 * (w_tile + o_tile + e_tile)

    while (_footprint(tm, tn) > vmem_budget_bytes
           and tn > 256 and tn % 256 == 0 and N % (tn // 2) == 0):
        tn //= 2
    while (_footprint(tm, tn) > vmem_budget_bytes
           and tm > 16 and tm % 16 == 0 and B % (tm // 2) == 0):
        tm //= 2

    # Per-row weight normalization (F.normalize eps = 1e-12) folded into the
    # cast pass — one fused XLA pass over W in HBM, nothing extra in-kernel.
    w_f32 = weight.astype(jnp.float32)
    inv_norm = 1.0 / jnp.maximum(
        jnp.sqrt(jnp.sum(w_f32 * w_f32, axis=1, keepdims=True)), 1e-12)
    w_op = (w_f32 * inv_norm).astype(op_dtype)
    emb_op = embeddings.astype(op_dtype)
    lab2d = label_ids.astype(jnp.int32).reshape(B, 1)

    kernel = functools.partial(
        _arcface_kernel,
        s=float(scale),
        s_cos_m=float(scale * math.cos(margin)),
        s_sin_m=float(scale * math.sin(margin)),
        emb_resident=emb_resident,
    )

    if emb_resident:
        emb_spec = pl.BlockSpec((B, D), lambda j, i: (0, 0))   # resident, 1 DMA
        lab_spec = pl.BlockSpec((B, 1), lambda j, i: (0, 0))
    else:
        emb_spec = pl.BlockSpec((tm, D), lambda j, i: (i, 0))  # streamed per i
        lab_spec = pl.BlockSpec((tm, 1), lambda j, i: (i, 0))

    # Class-tile axis OUTER (megacore-sharded on v7x), batch-tile axis INNER:
    # the weight tile index is constant over the inner loop, so each core reads
    # W from HBM exactly once.  Double buffering over j hides the next W fetch
    # behind the current tile's matmul even when B//tm is small.
    grid = (N // tn, B // tm)

    return pl.pallas_call(
        kernel,
        out_shape=jax.ShapeDtypeStruct((B, N), out_dtype),
        grid_spec=pltpu.PrefetchScalarGridSpec(
            num_scalar_prefetch=0,
            grid=grid,
            in_specs=[
                emb_spec,                                      # embeddings
                pl.BlockSpec((tn, D), lambda j, i: (j, 0)),    # normalized W tile
                lab_spec,                                      # label ids
            ],
            out_specs=pl.BlockSpec((tm, tn), lambda j, i: (i, j)),
        ),
        compiler_params=pltpu.CompilerParams(
            dimension_semantics=("parallel", "arbitrary"),
        ),
    )(emb_op, w_op, lab2d)


def arcface_loss_reference(embeddings, weight, label_ids, num_classes, *,
                           margin=0.5, scale=30.0):
    """Exact (arccos-based, full f32) reference matching the PyTorch module."""
    norm = jnp.sqrt(jnp.sum(weight * weight, axis=1, keepdims=True))
    w_n = weight / jnp.maximum(norm, 1e-12)
    cos_theta = jnp.clip(embeddings @ w_n.T, -1.0, 1.0)
    target = jnp.cos(jnp.arccos(cos_theta) + margin)
    labels = jax.nn.one_hot(label_ids, num_classes, dtype=jnp.float32)
    logits = cos_theta * (1.0 - labels) + target * labels
    return logits * scale


def arcface_matched_reference(embeddings, weight, label_ids, num_classes, *,
                              margin=0.5, scale=30.0, operand_dtype=jnp.bfloat16):
    """Reference mirroring the kernel's algorithm (normalize-then-cast operands,
    sqrt identity) for tight checking of the reduced-precision fast path."""
    w_f32 = weight.astype(jnp.float32)
    inv_norm = 1.0 / jnp.maximum(
        jnp.sqrt(jnp.sum(w_f32 * w_f32, axis=1, keepdims=True)), 1e-12)
    w = (w_f32 * inv_norm).astype(operand_dtype).astype(jnp.float32)
    e = embeddings.astype(operand_dtype).astype(jnp.float32)
    cos_theta = jnp.clip(e @ w.T, -1.0, 1.0)
    sin_theta = jnp.sqrt(jnp.maximum(1.0 - cos_theta * cos_theta, 0.0))
    target = cos_theta * jnp.cos(margin) - sin_theta * jnp.sin(margin)
    labels = jax.nn.one_hot(label_ids, num_classes, dtype=jnp.float32)
    logits = cos_theta * (1.0 - labels) + target * labels
    return logits * scale


if __name__ == "__main__":
    key = jax.random.PRNGKey(0)
    k_emb, k_w, k_lab = jax.random.split(key, 3)

    B = 256
    D = 512                 # fixed by the module (weight: num_classes x 512)
    num_classes = 1024
    margin, scale = 0.5, 30.0

    # Unit-norm embeddings (standard ArcFace usage): keeps cos_theta well inside
    # (-1, 1) so the acos-identity comparison is numerically stable.
    emb = jax.random.normal(k_emb, (B, D), dtype=jnp.float32)
    embeddings = emb / jnp.linalg.norm(emb, axis=1, keepdims=True)

    # Deterministic xavier_uniform_ init for the weight parameter.
    bound = (6.0 / (num_classes + D)) ** 0.5
    weight = jax.random.uniform(k_w, (num_classes, D), dtype=jnp.float32,
                                minval=-bound, maxval=bound)

    label_ids = jax.random.randint(k_lab, (B,), 0, num_classes)

    ref_f32 = arcface_loss_reference(embeddings, weight, label_ids, num_classes,
                                     margin=margin, scale=scale)

    # 1) f32-operand kernel with explicit small tiles -> multi-tile grid, which
    #    exercises the in-kernel row slicing and the per-tile mask offset.
    out_f32 = jax.block_until_ready(
        arcface_loss_forward(embeddings, weight, label_ids, margin=margin,
                             scale=scale, use_bf16_matmul=False, tm=64, tn=256))
    assert out_f32.shape == (B, num_classes)
    assert jnp.allclose(out_f32, ref_f32, atol=2e-3, rtol=2e-3), (
        f"f32 path: max abs err {jnp.max(jnp.abs(out_f32 - ref_f32))}")

    # 2) bf16-operand kernel at default tiles (embeddings VMEM-resident).
    out_bf16 = jax.block_until_ready(
        arcface_loss_forward(embeddings, weight, label_ids, margin=margin,
                             scale=scale))
    ref_bf16 = arcface_matched_reference(embeddings, weight, label_ids,
                                         num_classes, margin=margin, scale=scale)
    assert jnp.allclose(out_bf16, ref_bf16, atol=2e-3, rtol=2e-3), (
        f"bf16 path vs matched ref: max abs err "
        f"{jnp.max(jnp.abs(out_bf16 - ref_bf16))}")
    assert jnp.allclose(out_bf16, ref_f32, atol=1e-1, rtol=1e-1), (
        f"bf16 path vs f32 ref: max abs err {jnp.max(jnp.abs(out_bf16 - ref_f32))}")

    # 3) streaming (non-resident) embeddings fallback path.
    out_stream = jax.block_until_ready(
        arcface_loss_forward(embeddings, weight, label_ids, margin=margin,
                             scale=scale, tm=64, tn=512, emb_resident=False))
    assert jnp.allclose(out_stream, ref_bf16, atol=2e-3, rtol=2e-3), (
        f"streaming path: max abs err {jnp.max(jnp.abs(out_stream - ref_bf16))}")

    # 4) bf16 output option (halves the dominant (B, N) HBM store stream).
    out_lo = jax.block_until_ready(
        arcface_loss_forward(embeddings, weight, label_ids, margin=margin,
                             scale=scale, out_dtype=jnp.bfloat16))
    assert out_lo.dtype == jnp.bfloat16
    assert jnp.allclose(out_lo.astype(jnp.float32), ref_f32, atol=2e-1, rtol=2e-1), (
        f"bf16-out path: max abs err "
        f"{jnp.max(jnp.abs(out_lo.astype(jnp.float32) - ref_f32))}")

    print("KERNEL_OK")
</pallas_src>

<mosaic_0001>
module attributes {stable_mosaic.version = 11 : i64} {
  func.func @_arcface_kernel(%arg0: i32, %arg1: i32, %arg2: memref<256x512xf32, #tpu.memory_space<vmem>>, %arg3: memref<256x512xf32, #tpu.memory_space<vmem>>, %arg4: memref<256x1xi32, #tpu.memory_space<vmem>>, %arg5: memref<64x256xf32, #tpu.memory_space<vmem>>) attributes {dimension_semantics = [#tpu.dimension_semantics<parallel>, #tpu.dimension_semantics<arbitrary>], iteration_bounds = array<i64: 4, 4>, scalar_prefetch = 0 : i64, scratch_operands = 0 : i64, tpu.core_type = #tpu.core_type<tc>, window_params = [{pipeline_mode = #tpu.pipeline_mode<synchronous>, transform_indices = @transform_0, window_bounds = array<i64: 256, 512>}, {transform_indices = @transform_1, window_bounds = array<i64: 256, 512>}, {pipeline_mode = #tpu.pipeline_mode<synchronous>, transform_indices = @transform_2, window_bounds = array<i64: 256, 1>}, {transform_indices = @transform_3, window_bounds = array<i64: 64, 256>}]} {
    %c64_i32 = arith.constant 64 : i32
    %0 = arith.muli %arg1, %c64_i32 : i32
    %1 = tpu.assume_multiple %0, 64 : i32
    %2 = arith.index_cast %1 : i32 to index
    %c0 = arith.constant 0 : index
    %3 = vector.load %arg2[%2, %c0] : memref<256x512xf32, #tpu.memory_space<vmem>>, vector<64x512xf32>
    %4 = arith.index_cast %1 : i32 to index
    %c0_0 = arith.constant 0 : index
    %5 = vector.load %arg4[%4, %c0_0] : memref<256x1xi32, #tpu.memory_space<vmem>>, vector<64x1xi32>
    %c0_1 = arith.constant 0 : index
    %c0_2 = arith.constant 0 : index
    %6 = vector.load %arg3[%c0_1, %c0_2] : memref<256x512xf32, #tpu.memory_space<vmem>>, vector<256x512xf32>
    %cst = arith.constant dense<0.000000e+00> : vector<64x256xf32>
    %7 = tpu.matmul %3, %6, %cst {dimension_numbers = #tpu.dot_dimension_numbers<[1], [1], [0], [0], [0, 0, 1, 0], [], []>} : vector<64x512xf32>, vector<256x512xf32>, vector<64x256xf32> -> vector<64x256xf32>
    %cst_3 = arith.constant -1.000000e+00 : f32
    %cst_4 = arith.constant 1.000000e+00 : f32
    %8 = vector.broadcast %cst_3 : f32 to vector<64x256xf32>
    %9 = arith.maximumf %8, %7 : vector<64x256xf32>
    %10 = vector.broadcast %cst_4 : f32 to vector<64x256xf32>
    %11 = arith.minimumf %10, %9 : vector<64x256xf32>
    %12 = arith.mulf %11, %11 : vector<64x256xf32>
    %cst_5 = arith.constant 1.000000e+00 : f32
    %13 = vector.broadcast %cst_5 : f32 to vector<64x256xf32>
    %14 = arith.subf %13, %12 : vector<64x256xf32>
    %cst_6 = arith.constant 0.000000e+00 : f32
    %15 = vector.broadcast %cst_6 : f32 to vector<64x256xf32>
    %16 = arith.maximumf %14, %15 : vector<64x256xf32>
    %17 = math.sqrt %16 : vector<64x256xf32>
    %cst_7 = arith.constant 3.000000e+01 : f32
    %18 = vector.broadcast %cst_7 : f32 to vector<64x256xf32>
    %19 = arith.mulf %11, %18 : vector<64x256xf32>
    %cst_8 = arith.constant 26.3274765 : f32
    %20 = vector.broadcast %cst_8 : f32 to vector<64x256xf32>
    %21 = arith.mulf %11, %20 : vector<64x256xf32>
    %cst_9 = arith.constant 14.3827658 : f32
    %22 = vector.broadcast %cst_9 : f32 to vector<64x256xf32>
    %23 = arith.mulf %17, %22 : vector<64x256xf32>
    %24 = arith.subf %21, %23 : vector<64x256xf32>
    %25 = tpu.iota {dimensions = array<i32: 1>} : vector<64x256xi32>
    %c256_i32 = arith.constant 256 : i32
    %26 = arith.muli %arg0, %c256_i32 : i32
    %27 = vector.broadcast %26 : i32 to vector<64x1xi32>
    %28 = arith.subi %5, %27 : vector<64x1xi32>
    %29 = vector.broadcast %28 : vector<64x1xi32> to vector<64x256xi32>
    %30 = arith.cmpi eq, %25, %29 : vector<64x256xi32>
    %31 = arith.select %30, %24, %19 : vector<64x256xi1>, vector<64x256xf32>
    %c0_10 = arith.constant 0 : index
    %c0_11 = arith.constant 0 : index
    %32 = vector.load %arg5[%c0_10, %c0_11] : memref<64x256xf32, #tpu.memory_space<vmem>>, vector<64x256xf32>
    tpu.vector_store %arg5[%c0_10, %c0_11], %31 {strides = array<i32>} : memref<64x256xf32, #tpu.memory_space<vmem>>, vector<64x256xf32>,
    return
  }
  func.func @transform_0(%arg0: i32, %arg1: i32) -> (i32, i32) {
    %c0_i32 = arith.constant 0 : i32
    %c0_i32_0 = arith.constant 0 : i32
    %c0_i32_1 = arith.constant 0 : i32
    return %c0_i32, %c0_i32_0 : i32, i32
  }
  func.func @transform_1(%arg0: i32, %arg1: i32) -> (i32, i32) {
    %c0_i32 = arith.constant 0 : i32
    %c0_i32_0 = arith.constant 0 : i32
    return %arg0, %c0_i32 : i32, i32
  }
  func.func @transform_2(%arg0: i32, %arg1: i32) -> (i32, i32) {
    %c0_i32 = arith.constant 0 : i32
    %c0_i32_0 = arith.constant 0 : i32
    %c0_i32_1 = arith.constant 0 : i32
    return %c0_i32, %c0_i32_0 : i32, i32
  }
  func.func @transform_3(%arg0: i32, %arg1: i32) -> (i32, i32) {
    %c0_i32 = arith.constant 0 : i32
    return %arg1, %arg0 : i32, i32
  }
}

</mosaic_0001>

<llo_original>
// kernel: tpu_custom_call.1
$region0: #{tpu_custom_call.1}
  #allocation0 [shape = 'u32[]', space=smem, size = 0x4, offset = 0x4, fixed_abs, tag = 'smem constant byte address 0x4 - core index']
  #allocation1 [shape = 'u32[144,128]{1,0:T(1,128)}', space=vmem, size = 0x12000, scoped, tag = 'internal scratch']
  %s0 = inlined_call_operand.hbm [shape: f32[256,512], index: 0, kind: input, shape index: {}]
  %s1 = inlined_call_operand.hbm [shape: f32[1024,512], index: 1, kind: input, shape index: {}]
  %s2 = inlined_call_operand.vmem [shape: s32[256,1], index: 2, kind: input, shape index: {}]
  %s3 = inlined_call_operand.hbm [shape: f32[256,1024], index: 3, kind: output, shape index: {}]
  %s4 = sld [smem:[#allocation0]]
  $region53: #{tpu_custom_call.1} parent=0
    _
  %s6 = ssub.s32 1, %s4
  %s7 = scalar_select 0, %s6, %s4
  $region1: #{tpu_custom_call.1} parent=0
    #allocation2 [shape = 'u8[524288]{0}', space=vmem, size = 0x80000, scoped, tag = 'input window, operand 0, single buffered']
    #allocation3 [shape = 's32[2]{0}', space=sflag, size = 0x8, scoped, tag = 'scoped memory for tpu_custom_call.1']
    #allocation4 [shape = 's32[2]{0}', space=sflag, size = 0x8, scoped, tag = 'scoped memory for tpu_custom_call.1']
    #allocation5 [shape = 'u8[1048576]{0}', space=vmem, size = 0x100000, scoped, tag = 'input window, operand 1']
    #allocation6 [shape = 's32[2]{0}', space=sflag, size = 0x8, scoped, tag = 'scoped memory for tpu_custom_call.1']
    #allocation7 [shape = 'u8[131072]{0}', space=vmem, size = 0x20000, scoped, tag = 'output window, operand 0']
    %8 = vsyncpa [#allocation3], 0
    %9 = vsyncpa [#allocation6], 0
    %s10 = scalar_lea.sflag [#allocation6], 1
    %11 = vsyncpa %s10, 0
    %12 = vsyncpa [#allocation4], 0
    %s13 = scalar_lea.sflag [#allocation4], 1
    %14 = vsyncpa %s13, 0
    loop: start=0, step=1, limit=18
    $region2: #{tpu_custom_call.1} parent=1 // loop_pre_header
      _
    $region3: #{tpu_custom_call.1} parent=1 // loop_header
      %s16 = sphi 0, %s20
      %p17 = scmp.ge.s32.totalorder %s16, 18
      %s23 = sphi 0, %s35
      %s24 = sphi 0, %s31
      %s25 = sphi 0, %s23
      %s26 = sphi 0, %s24
      %s27 = sphi 0, %s25
      %s28 = sphi 0, %s26
      %s36 = sphi 0, %s36
      %s38 = sphi 0, %s36
      %s39 = sphi 0, %s38
      %s53 = sphi 0, %s39
      %s59 = sphi 0, %s61
      %s62 = sphi 0, %s59
      %s63 = sphi 0, %s62
      %s79 = sphi 0, %s63
      %s83 = sphi 0, %s83
      %s85 = sphi 0, %s83
      %s86 = sphi 0, %s85
      %s100 = sphi 0, %s86
      %s108 = sphi 0, %s110
      %s111 = sphi 0, %s108
      %s112 = sphi 0, %s111
      %s128 = sphi 0, %s112
    $region4: #{tpu_custom_call.1} parent=1 // loop_header_branch
      %19 = sbr.rel (%p17) target = $region8
    $region5: #{tpu_custom_call.1} parent=1 // loop_body
      %s21 = ssub.s32 %s16, 1
      %s22 = ssub.s32 %s16, 2
      %s29 = sadd.s32 1, %s24
      %p30 = scmp.ge.s32.totalorder %s29, 4
      %s31 = scalar_select %p30, 0, %s29
      %s32 = sadd.s32 1, %s23
      %s33 = scalar_select %p30, %s32, %s23
      %p34 = scmp.ge.s32.totalorder %s33, 4
      %s35 = scalar_select %p34, 0, %s33
      %s37 = sadd.s32 %s36, 1
      %p40 = scmp.eq.s32.totalorder %s16, 15
      %p41 = scmp.ne.s32.totalorder %s36, %s38
      %p42 = scmp.eq.s32.totalorder %s16, 0
      %p43 = por %p41, %p42
      %p44 = scmp.ne.s32.totalorder %s36, %s38
      %p45 = scmp.eq.s32.totalorder %s21, 15
      %p46 = por %p44, %p45
      %p47 = scmp.ne.s32.totalorder %s38, %s39
      %p48 = scmp.eq.s32.totalorder %s21, 0
      %p49 = por %p47, %p48
      %p50 = scmp.ne.s32.totalorder %s38, %s39
      %p51 = scmp.eq.s32.totalorder %s22, 15
      %p52 = por %p50, %p51
      %p54 = scmp.ne.s32.totalorder %s39, %s53
      %p55 = scmp.eq.s32.totalorder %s22, 0
      %p56 = por %p54, %p55
      %s57 = ssub.s32 %s23, %s35
      %p58 = scmp.eq.s32.totalorder %s57, 0
      %s60 = sadd.s32 %s59, 1
      %s61 = scalar_select %p58, %s59, %s60
      %p64 = pneg %p58
      %p65 = scmp.eq.s32.totalorder %s16, 15
      %p66 = por %p64, %p65
      %p67 = scmp.ne.s32.totalorder %s59, %s62
      %p68 = scmp.eq.s32.totalorder %s16, 0
      %p69 = por %p67, %p68
      %p70 = scmp.ne.s32.totalorder %s59, %s62
      %p71 = scmp.eq.s32.totalorder %s21, 15
      %p72 = por %p70, %p71
      %p73 = scmp.ne.s32.totalorder %s62, %s63
      %p74 = scmp.eq.s32.totalorder %s21, 0
      %p75 = por %p73, %p74
      %p76 = scmp.ne.s32.totalorder %s62, %s63
      %p77 = scmp.eq.s32.totalorder %s22, 15
      %p78 = por %p76, %p77
      %p80 = scmp.ne.s32.totalorder %s63, %s79
      %p81 = scmp.eq.s32.totalorder %s22, 0
      %p82 = por %p80, %p81
      %s84 = sadd.s32 %s83, 1
      %p87 = scmp.eq.s32.totalorder %s16, 15
      %p88 = scmp.ne.s32.totalorder %s83, %s85
      %p89 = scmp.eq.s32.totalorder %s16, 0
      %p90 = por %p88, %p89
      %p91 = scmp.ne.s32.totalorder %s83, %s85
      %p92 = scmp.eq.s32.totalorder %s21, 15
      %p93 = por %p91, %p92
      %p94 = scmp.ne.s32.totalorder %s85, %s86
      %p95 = scmp.eq.s32.totalorder %s21, 0
      %p96 = por %p94, %p95
      %p97 = scmp.ne.s32.totalorder %s85, %s86
      %p98 = scmp.eq.s32.totalorder %s22, 15
      %p99 = por %p97, %p98
      %p101 = scmp.ne.s32.totalorder %s86, %s100
      %p102 = scmp.eq.s32.totalorder %s22, 0
      %p103 = por %p101, %p102
      %s104 = ssub.s32 %s24, %s31
      %s105 = ssub.s32 %s23, %s35
      %s106 = sor.u32 %s104, %s105
      %p107 = scmp.eq.s32.totalorder %s106, 0
      %s109 = sadd.s32 %s108, 1
      %s110 = scalar_select %p107, %s108, %s109
      %p113 = pneg %p107
      %p114 = scmp.eq.s32.totalorder %s16, 15
      %p115 = por %p113, %p114
      %p116 = scmp.ne.s32.totalorder %s108, %s111
      %p117 = scmp.eq.s32.totalorder %s16, 0
      %p118 = por %p116, %p117
      %p119 = scmp.ne.s32.totalorder %s108, %s111
      %p120 = scmp.eq.s32.totalorder %s21, 15
      %p121 = por %p119, %p120
      %p122 = scmp.ne.s32.totalorder %s111, %s112
      %p123 = scmp.eq.s32.totalorder %s21, 0
      %p124 = por %p122, %p123
      %p125 = scmp.ne.s32.totalorder %s111, %s112
      %p126 = scmp.eq.s32.totalorder %s22, 15
      %p127 = por %p125, %p126
      %p129 = scmp.ne.s32.totalorder %s112, %s128
      %p130 = scmp.eq.s32.totalorder %s22, 0
      %p131 = por %p129, %p130
      %p132 = scmp.le.s32.totalorder 1, %s16
      %p133 = scmp.lt.s32.totalorder %s16, 17
      %p134 = pnand %p132, %p133
      %p135 = pneg %p134
      // Predicated region
      $region9: #{tpu_custom_call.1} parent=5 // pred_check
        _
      $region10: #{tpu_custom_call.1} parent=5 // pred_check_branch
        %137 = sbr.rel (%p134) target = $region12
      $region11: #{tpu_custom_call.1} parent=5 // pred_region
        %s138 = ssub.s32 %s16, 1
        // Predicated region
        $region13: #{tpu_custom_call.1} parent=11 // pred_check
          %p139 = pneg %p49
        $region14: #{tpu_custom_call.1} parent=11 // pred_check_branch
          %141 = sbr.rel (%p139) target = $region16
        $region15: #{tpu_custom_call.1} parent=11 // pred_region
          %s143 = ssub.s32 16384, 16384
          %144 = vsyncadd [#allocation3], %s143
          %s145 = sshll.u32 [#allocation2], 4
          %s146 = int_to_ptr.vmem [resolvable:$true] %s145
          %151 = dma.hbm_to_vmem [thread:$0]  %s0, 16384, %s146, [#allocation3], 512, 512, 32
        $region16: #{tpu_custom_call.1} parent=11 // pred_fallthru
          _
        // Predicated region
        $region17: #{tpu_custom_call.1} parent=11 // pred_check
          %p152 = pneg %p96
        $region18: #{tpu_custom_call.1} parent=11 // pred_check_branch
          %154 = sbr.rel (%p152) target = $region20
        $region19: #{tpu_custom_call.1} parent=11 // pred_region
          _
        $region20: #{tpu_custom_call.1} parent=11 // pred_fallthru
          _
      $region12: #{tpu_custom_call.1} parent=5 // pred_fallthru
        _
      %p155 = scmp.lt.s32.totalorder %s16, 16
      // Predicated region
      $region21: #{tpu_custom_call.1} parent=5 // pred_check
        %p156 = pneg %p155
      $region22: #{tpu_custom_call.1} parent=5 // pred_check_branch
        %158 = sbr.rel (%p156) target = $region24
      $region23: #{tpu_custom_call.1} parent=5 // pred_region
        // Predicated region
        $region25: #{tpu_custom_call.1} parent=23 // pred_check
          %p159 = pneg %p69
        $region26: #{tpu_custom_call.1} parent=23 // pred_check_branch
          %161 = sbr.rel (%p159) target = $region28
        $region27: #{tpu_custom_call.1} parent=23 // pred_region
          %s162 = sand.u32 %s59, 1
          %s163 = scalar_lea.sflag [#allocation6], %s162
          %s164 = sand.u32 %s59, 1
          %s165 = smul.addr %s164, 1024
          %s166 = scalar_lea.vmem [#allocation5], %s165
          %s167 = smul.u32 32, %s23
          %s169 = ssub.s32 16384, 16384
          %170 = vsyncadd %s163, %s169
          %s171 = smul.addr %s167, 4
          %s172 = smul.addr %s171, 128
          %s173 = scalar_lea.hbm %s1, %s172
          %s174 = sshll.u32 %s166, 4
          %s175 = int_to_ptr.vmem [resolvable:$true] %s174
          %180 = dma.hbm_to_vmem [thread:$0]  %s173, 16384, %s175, %s163, 512, 512, 32
        $region28: #{tpu_custom_call.1} parent=23 // pred_fallthru
          _
      $region24: #{tpu_custom_call.1} parent=5 // pred_fallthru
        _
      %p181 = scmp.le.s32.totalorder 1, %s16
      %p182 = scmp.lt.s32.totalorder %s16, 17
      %p183 = pnand %p181, %p182
      %p184 = pneg %p183
      // Predicated region
      $region29: #{tpu_custom_call.1} parent=5 // pred_check
        _
      $region30: #{tpu_custom_call.1} parent=5 // pred_check_branch
        %186 = sbr.rel (%p183) target = $region32
      $region31: #{tpu_custom_call.1} parent=5 // pred_region
        %s187 = ssub.s32 %s16, 1
        // Predicated region
        $region33: #{tpu_custom_call.1} parent=31 // pred_check
          %p188 = pneg %p49
        $region34: #{tpu_custom_call.1} parent=31 // pred_check_branch
          %190 = sbr.rel (%p188) target = $region36
        $region35: #{tpu_custom_call.1} parent=31 // pred_region
          %191 = dma.done [#allocation3], 16384
        $region36: #{tpu_custom_call.1} parent=31 // pred_fallthru
          _
        %s192 = sand.u32 %s62, 1
        %s193 = scalar_lea.sflag [#allocation6], %s192
        %s194 = sand.u32 %s62, 1
        %s195 = smul.addr %s194, 1024
        %s196 = scalar_lea.vmem [#allocation5], %s195
        // Predicated region
        $region37: #{tpu_custom_call.1} parent=31 // pred_check
          %p197 = pneg %p75
        $region38: #{tpu_custom_call.1} parent=31 // pred_check_branch
          %199 = sbr.rel (%p197) target = $region40
        $region39: #{tpu_custom_call.1} parent=31 // pred_region
          %200 = dma.done %s193, 16384
        $region40: #{tpu_custom_call.1} parent=31 // pred_fallthru
          _
        %p201 = pneg %p49
        %p202 = pneg %p46
        %s203 = sand.u32 %s62, 1
        %s204 = scalar_lea.sflag [#allocation6], %s203
        %s205 = sand.u32 %s62, 1
        %s206 = smul.addr %s205, 1024
        %s207 = scalar_lea.vmem [#allocation5], %s206
        %p208 = pneg %p75
        %p209 = pneg %p72
        %p210 = pneg %p96
        %p211 = pneg %p93
        %p212 = pneg %p124
        %p213 = pneg %p121
        %s214 = sand.u32 %s111, 1
        %s215 = scalar_lea.sflag [#allocation4], %s214
        %s216 = sand.u32 %s111, 1
        %s217 = smul.addr %s216, 128
        %s218 = scalar_lea.vmem [#allocation7], %s217
        %s219 = smul.u32 32, %s25
        %s220 = smul.u32 8, %s26
        %s221 = smul.u32 2, %s25
        %s222 = smul.u32 %s26, 64
        %s223 = sshra.s32 %s222, 3
        %s224 = sand.u32 %s222, 7
        %s225 = smul.u32 %s223, 4
        %s226 = smul.addr %s225, 8
        %s227 = scalar_lea.vmem [#allocation2], %s226
        %v228 = vld [vmem:[%s227] sm:$0xff]
        %v229 = vld [vmem:[%s227 + $0x8] sm:$0xff]
        %v230 = vld [vmem:[%s227 + $0x10] sm:$0xff]
        %v231 = vld [vmem:[%s227 + $0x18] sm:$0xff]
        %v232 = vld [vmem:[%s227 + $0x20] sm:$0xff]
        %v233 = vld [vmem:[%s227 + $0x28] sm:$0xff]
        %v234 = vld [vmem:[%s227 + $0x30] sm:$0xff]
        %v235 = vld [vmem:[%s227 + $0x38] sm:$0xff]
        %v236 = vld [vmem:[%s227 + $0x40] sm:$0xff]
        %v237 = vld [vmem:[%s227 + $0x48] sm:$0xff]
        %v238 = vld [vmem:[%s227 + $0x50] sm:$0xff]
        %v239 = vld [vmem:[%s227 + $0x58] sm:$0xff]
        %v240 = vld [vmem:[%s227 + $0x60] sm:$0xff]
        %v241 = vld [vmem:[%s227 + $0x68] sm:$0xff]
        %v242 = vld [vmem:[%s227 + $0x70] sm:$0xff]
        %v243 = vld [vmem:[%s227 + $0x78] sm:$0xff]
        %v244 = vld [vmem:[%s227 + $0x80] sm:$0xff]
        %v245 = vld [vmem:[%s227 + $0x88] sm:$0xff]
        %v246 = vld [vmem:[%s227 + $0x90] sm:$0xff]
        %v247 = vld [vmem:[%s227 + $0x98] sm:$0xff]
        %v248 = vld [vmem:[%s227 + $0xa0] sm:$0xff]
        %v249 = vld [vmem:[%s227 + $0xa8] sm:$0xff]
        %v250 = vld [vmem:[%s227 + $0xb0] sm:$0xff]
        %v251 = vld [vmem:[%s227 + $0xb8] sm:$0xff]
        %v252 = vld [vmem:[%s227 + $0xc0] sm:$0xff]
        %v253 = vld [vmem:[%s227 + $0xc8] sm:$0xff]
        %v254 = vld [vmem:[%s227 + $0xd0] sm:$0xff]
        %v255 = vld [vmem:[%s227 + $0xd8] sm:$0xff]
        %v256 = vld [vmem:[%s227 + $0xe0] sm:$0xff]
        %v257 = vld [vmem:[%s227 + $0xe8] sm:$0xff]
        %v258 = vld [vmem:[%s227 + $0xf0] sm:$0xff]
        %v259 = vld [vmem:[%s227 + $0xf8] sm:$0xff]
        %s260 = scalar_lea.vmem %s2, %s222
        %v261 = vld [vmem:[%s260] sm:$0xff]
        %v262 = vld [vmem:[%s260 + $0x8] sm:$0xff]
        %v263 = vld [vmem:[%s260 + $0x10] sm:$0xff]
        %v264 = vld [vmem:[%s260 + $0x18] sm:$0xff]
        %v265 = vld [vmem:[%s260 + $0x20] sm:$0xff]
        %v266 = vld [vmem:[%s260 + $0x28] sm:$0xff]
        %v267 = vld [vmem:[%s260 + $0x30] sm:$0xff]
        %v268 = vld [vmem:[%s260 + $0x38] sm:$0xff]
        %v269 = vld [vmem:[%s196] sm:$0xff]
        %v270 = vld [vmem:[%s196 + $0x8] sm:$0xff]
        %v271 = vld [vmem:[%s196 + $0x10] sm:$0xff]
        %v272 = vld [vmem:[%s196 + $0x18] sm:$0xff]
        %v273 = vld [vmem:[%s196 + $0x20] sm:$0xff]
        %v274 = vld [vmem:[%s196 + $0x28] sm:$0xff]
        %v275 = vld [vmem:[%s196 + $0x30] sm:$0xff]
        %v276 = vld [vmem:[%s196 + $0x38] sm:$0xff]
        %v277 = vld [vmem:[%s196 + $0x40] sm:$0xff]
        %v278 = vld [vmem:[%s196 + $0x48] sm:$0xff]
        %v279 = vld [vmem:[%s196 + $0x50] sm:$0xff]
        %v280 = vld [vmem:[%s196 + $0x58] sm:$0xff]
        %v281 = vld [vmem:[%s196 + $0x60] sm:$0xff]
        %v282 = vld [vmem:[%s196 + $0x68] sm:$0xff]
        %v283 = vld [vmem:[%s196 + $0x70] sm:$0xff]
        %v284 = vld [vmem:[%s196 + $0x78] sm:$0xff]
        %v285 = vld [vmem:[%s196 + $0x80] sm:$0xff]
        %v286 = vld [vmem:[%s196 + $0x88] sm:$0xff]
        %v287 = vld [vmem:[%s196 + $0x90] sm:$0xff]
        %v288 = vld [vmem:[%s196 + $0x98] sm:$0xff]
        %v289 = vld [vmem:[%s196 + $0xa0] sm:$0xff]
        %v290 = vld [vmem:[%s196 + $0xa8] sm:$0xff]
        %v291 = vld [vmem:[%s196 + $0xb0] sm:$0xff]
        %v292 = vld [vmem:[%s196 + $0xb8] sm:$0xff]
        %v293 = vld [vmem:[%s196 + $0xc0] sm:$0xff]
        %v294 = vld [vmem:[%s196 + $0xc8] sm:$0xff]
        %v295 = vld [vmem:[%s196 + $0xd0] sm:$0xff]
        %v296 = vld [vmem:[%s196 + $0xd8] sm:$0xff]
        %v297 = vld [vmem:[%s196 + $0xe0] sm:$0xff]
        %v298 = vld [vmem:[%s196 + $0xe8] sm:$0xff]
        %v299 = vld [vmem:[%s196 + $0xf0] sm:$0xff]
        %v300 = vld [vmem:[%s196 + $0xf8] sm:$0xff]
        %v301 = vld [vmem:[%s196 + $0x100] sm:$0xff]
        %v302 = vld [vmem:[%s196 + $0x108] sm:$0xff]
        %v303 = vld [vmem:[%s196 + $0x110] sm:$0xff]
        %v304 = vld [vmem:[%s196 + $0x118] sm:$0xff]
        %v305 = vld [vmem:[%s196 + $0x120] sm:$0xff]
        %v306 = vld [vmem:[%s196 + $0x128] sm:$0xff]
        %v307 = vld [vmem:[%s196 + $0x130] sm:$0xff]
        %v308 = vld [vmem:[%s196 + $0x138] sm:$0xff]
        %v309 = vld [vmem:[%s196 + $0x140] sm:$0xff]
        %v310 = vld [vmem:[%s196 + $0x148] sm:$0xff]
        %v311 = vld [vmem:[%s196 + $0x150] sm:$0xff]
        %v312 = vld [vmem:[%s196 + $0x158] sm:$0xff]
        %v313 = vld [vmem:[%s196 + $0x160] sm:$0xff]
        %v314 = vld [vmem:[%s196 + $0x168] sm:$0xff]
        %v315 = vld [vmem:[%s196 + $0x170] sm:$0xff]
        %v316 = vld [vmem:[%s196 + $0x178] sm:$0xff]
        %v317 = vld [vmem:[%s196 + $0x180] sm:$0xff]
        %v318 = vld [vmem:[%s196 + $0x188] sm:$0xff]
        %v319 = vld [vmem:[%s196 + $0x190] sm:$0xff]
        %v320 = vld [vmem:[%s196 + $0x198] sm:$0xff]
        %v321 = vld [vmem:[%s196 + $0x1a0] sm:$0xff]
        %v322 = vld [vmem:[%s196 + $0x1a8] sm:$0xff]
        %v323 = vld [vmem:[%s196 + $0x1b0] sm:$0xff]
        %v324 = vld [vmem:[%s196 + $0x1b8] sm:$0xff]
        %v325 = vld [vmem:[%s196 + $0x1c0] sm:$0xff]
        %v326 = vld [vmem:[%s196 + $0x1c8] sm:$0xff]
        %v327 = vld [vmem:[%s196 + $0x1d0] sm:$0xff]
        %v328 = vld [vmem:[%s196 + $0x1d8] sm:$0xff]
        %v329 = vld [vmem:[%s196 + $0x1e0] sm:$0xff]
        %v330 = vld [vmem:[%s196 + $0x1e8] sm:$0xff]
        %v331 = vld [vmem:[%s196 + $0x1f0] sm:$0xff]
        %v332 = vld [vmem:[%s196 + $0x1f8] sm:$0xff]
        %v333 = vld [vmem:[%s196 + $0x200] sm:$0xff]
        %v334 = vld [vmem:[%s196 + $0x208] sm:$0xff]
        %v335 = vld [vmem:[%s196 + $0x210] sm:$0xff]
        %v336 = vld [vmem:[%s196 + $0x218] sm:$0xff]
        %v337 = vld [vmem:[%s196 + $0x220] sm:$0xff]
        %v338 = vld [vmem:[%s196 + $0x228] sm:$0xff]
        %v339 = vld [vmem:[%s196 + $0x230] sm:$0xff]
        %v340 = vld [vmem:[%s196 + $0x238] sm:$0xff]
        %v341 = vld [vmem:[%s196 + $0x240] sm:$0xff]
        %v342 = vld [vmem:[%s196 + $0x248] sm:$0xff]
        %v343 = vld [vmem:[%s196 + $0x250] sm:$0xff]
        %v344 = vld [vmem:[%s196 + $0x258] sm:$0xff]
        %v345 = vld [vmem:[%s196 + $0x260] sm:$0xff]
        %v346 = vld [vmem:[%s196 + $0x268] sm:$0xff]
        %v347 = vld [vmem:[%s196 + $0x270] sm:$0xff]
        %v348 = vld [vmem:[%s196 + $0x278] sm:$0xff]
        %v349 = vld [vmem:[%s196 + $0x280] sm:$0xff]
        %v350 = vld [vmem:[%s196 + $0x288] sm:$0xff]
        %v351 = vld [vmem:[%s196 + $0x290] sm:$0xff]
        %v352 = vld [vmem:[%s196 + $0x298] sm:$0xff]
        %v353 = vld [vmem:[%s196 + $0x2a0] sm:$0xff]
        %v354 = vld [vmem:[%s196 + $0x2a8] sm:$0xff]
        %v355 = vld [vmem:[%s196 + $0x2b0] sm:$0xff]
        %v356 = vld [vmem:[%s196 + $0x2b8] sm:$0xff]
        %v357 = vld [vmem:[%s196 + $0x2c0] sm:$0xff]
        %v358 = vld [vmem:[%s196 + $0x2c8] sm:$0xff]
        %v359 = vld [vmem:[%s196 + $0x2d0] sm:$0xff]
        %v360 = vld [vmem:[%s196 + $0x2d8] sm:$0xff]
        %v361 = vld [vmem:[%s196 + $0x2e0] sm:$0xff]
        %v362 = vld [vmem:[%s196 + $0x2e8] sm:$0xff]
        %v363 = vld [vmem:[%s196 + $0x2f0] sm:$0xff]
        %v364 = vld [vmem:[%s196 + $0x2f8] sm:$0xff]
        %v365 = vld [vmem:[%s196 + $0x300] sm:$0xff]
        %v366 = vld [vmem:[%s196 + $0x308] sm:$0xff]
        %v367 = vld [vmem:[%s196 + $0x310] sm:$0xff]
        %v368 = vld [vmem:[%s196 + $0x318] sm:$0xff]
        %v369 = vld [vmem:[%s196 + $0x320] sm:$0xff]
        %v370 = vld [vmem:[%s196 + $0x328] sm:$0xff]
        %v371 = vld [vmem:[%s196 + $0x330] sm:$0xff]
        %v372 = vld [vmem:[%s196 + $0x338] sm:$0xff]
        %v373 = vld [vmem:[%s196 + $0x340] sm:$0xff]
        %v374 = vld [vmem:[%s196 + $0x348] sm:$0xff]
        %v375 = vld [vmem:[%s196 + $0x350] sm:$0xff]
        %v376 = vld [vmem:[%s196 + $0x358] sm:$0xff]
        %v377 = vld [vmem:[%s196 + $0x360] sm:$0xff]
        %v378 = vld [vmem:[%s196 + $0x368] sm:$0xff]
        %v379 = vld [vmem:[%s196 + $0x370] sm:$0xff]
        %v380 = vld [vmem:[%s196 + $0x378] sm:$0xff]
        %v381 = vld [vmem:[%s196 + $0x380] sm:$0xff]
        %v382 = vld [vmem:[%s196 + $0x388] sm:$0xff]
        %v383 = vld [vmem:[%s196 + $0x390] sm:$0xff]
        %v384 = vld [vmem:[%s196 + $0x398] sm:$0xff]
        %v385 = vld [vmem:[%s196 + $0x3a0] sm:$0xff]
        %v386 = vld [vmem:[%s196 + $0x3a8] sm:$0xff]
        %v387 = vld [vmem:[%s196 + $0x3b0] sm:$0xff]
        %v388 = vld [vmem:[%s196 + $0x3b8] sm:$0xff]
        %v389 = vld [vmem:[%s196 + $0x3c0] sm:$0xff]
        %v390 = vld [vmem:[%s196 + $0x3c8] sm:$0xff]
        %v391 = vld [vmem:[%s196 + $0x3d0] sm:$0xff]
        %v392 = vld [vmem:[%s196 + $0x3d8] sm:$0xff]
        %v393 = vld [vmem:[%s196 + $0x3e0] sm:$0xff]
        %v394 = vld [vmem:[%s196 + $0x3e8] sm:$0xff]
        %v395 = vld [vmem:[%s196 + $0x3f0] sm:$0xff]
        %v396 = vld [vmem:[%s196 + $0x3f8] sm:$0xff]
        %397 = vmatprep.subr.mxu0 %v270
        %398 = vmatpush1.xpose.msra.mxu0 %v269
        %399 = vmatprep.subr.mxu0 %v274
        %400 = vmatpush1.xpose.msra.mxu0 %v273
        %401 = vmatprep.subr.mxu0 %v278
        %402 = vmatpush1.xpose.msra.mxu0 %v277
        %403 = vmatprep.subr.mxu0 %v282
        %404 = vmatpush1.xpose.msra.mxu0 %v281
        %405 = vmatprep.subr.mxu0 %v286
        %406 = vmatpush1.xpose.msra.mxu0 %v285
        %407 = vmatprep.subr.mxu0 %v290
        %408 = vmatpush1.xpose.msra.mxu0 %v289
        %409 = vmatprep.subr.mxu0 %v294
        %410 = vmatpush1.xpose.msra.mxu0 %v293
        %411 = vmatprep.subr.mxu0 %v298
        %412 = vmatpush1.xpose.msra.mxu0 %v297
        %413 = vmatprep.subr.mxu0 %v302
        %414 = vmatpush1.xpose.msra.mxu0 %v301
        %415 = vmatprep.subr.mxu0 %v306
        %416 = vmatpush1.xpose.msra.mxu0 %v305
        %417 = vmatprep.subr.mxu0 %v310
        %418 = vmatpush1.xpose.msra.mxu0 %v309
        %419 = vmatprep.subr.mxu0 %v314
        %420 = vmatpush1.xpose.msra.mxu0 %v313
        %421 = vmatprep.subr.mxu0 %v318
        %422 = vmatpush1.xpose.msra.mxu0 %v317
        %423 = vmatprep.subr.mxu0 %v322
        %424 = vmatpush1.xpose.msra.mxu0 %v321
        %425 = vmatprep.subr.mxu0 %v326
        %426 = vmatpush1.xpose.msra.mxu0 %v325
        %427 = vmatprep.subr.mxu0 %v330
        %428 = vmatpush1.xpose.msra.mxu0 %v329
        %429 = vmatprep.subr.mxu0 %v334
        %430 = vmatpush1.xpose.msra.mxu0 %v333
        %431 = vmatprep.subr.mxu0 %v338
        %432 = vmatpush1.xpose.msra.mxu0 %v337
        %433 = vmatprep.subr.mxu0 %v342
        %434 = vmatpush1.xpose.msra.mxu0 %v341
        %435 = vmatprep.subr.mxu0 %v346
        %436 = vmatpush1.xpose.msra.mxu0 %v345
        %437 = vmatprep.subr.mxu0 %v350
        %438 = vmatpush1.xpose.msra.mxu0 %v349
        %439 = vmatprep.subr.mxu0 %v354
        %440 = vmatpush1.xpose.msra.mxu0 %v353
        %441 = vmatprep.subr.mxu0 %v358
        %442 = vmatpush1.xpose.msra.mxu0 %v357
        %443 = vmatprep.subr.mxu0 %v362
        %444 = vmatpush1.xpose.msra.mxu0 %v361
        %445 = vmatprep.subr.mxu0 %v366
        %446 = vmatpush1.xpose.msra.mxu0 %v365
        %447 = vmatprep.subr.mxu0 %v370
        %448 = vmatpush1.xpose.msra.mxu0 %v369
        %449 = vmatprep.subr.mxu0 %v374
        %450 = vmatpush1.xpose.msra.mxu0 %v373
        %451 = vmatprep.subr.mxu0 %v378
        %452 = vmatpush1.xpose.msra.mxu0 %v377
        %453 = vmatprep.subr.mxu0 %v382
        %454 = vmatpush1.xpose.msra.mxu0 %v381
        %455 = vmatprep.subr.mxu0 %v386
        %456 = vmatpush1.xpose.msra.mxu0 %v385
        %457 = vmatprep.subr.mxu0 %v390
        %458 = vmatpush1.xpose.msra.mxu0 %v389
        %459 = vmatprep.subr.mxu0 %v394
        %460 = vmatpush1.xpose.msra.mxu0 %v393
        %461 = vmatprep.mubr.f32.mxu0 %v229
        %462 = vmatmul.mubr.f32.gmra.mrb[0].mxu0 %v228
        %v463 = vpop.f32.mrb[0].mxu0
        %v464 = vadd.f32 0.0, %v463
        %v465 = vpop.f32.mrb[0].mxu0
        %v466 = vadd.f32 0.0, %v465
        %467 = vmatprep.mubr.f32.mxu0 %v233
        %468 = vmatmul.mubr.f32.gmra.mrb[0].mxu0 %v232
        %v469 = vpop.f32.mrb[0].mxu0
        %v470 = vadd.f32 0.0, %v469
        %v471 = vpop.f32.mrb[0].mxu0
        %v472 = vadd.f32 0.0, %v471
        %473 = vmatprep.mubr.f32.mxu0 %v237
        %474 = vmatmul.mubr.f32.gmra.mrb[0].mxu0 %v236
        %v475 = vpop.f32.mrb[0].mxu0
        %v476 = vadd.f32 0.0, %v475
        %v477 = vpop.f32.mrb[0].mxu0
        %v478 = vadd.f32 0.0, %v477
        %479 = vmatprep.mubr.f32.mxu0 %v241
        %480 = vmatmul.mubr.f32.gmra.mrb[0].mxu0 %v240
        %v481 = vpop.f32.mrb[0].mxu0
        %v482 = vadd.f32 0.0, %v481
        %v483 = vpop.f32.mrb[0].mxu0
        %v484 = vadd.f32 0.0, %v483
        %485 = vmatprep.mubr.f32.mxu0 %v245
        %486 = vmatmul.mubr.f32.gmra.mrb[0].mxu0 %v244
        %v487 = vpop.f32.mrb[0].mxu0
        %v488 = vadd.f32 0.0, %v487
        %v489 = vpop.f32.mrb[0].mxu0
        %v490 = vadd.f32 0.0, %v489
        %491 = vmatprep.mubr.f32.mxu0 %v249
        %492 = vmatmul.mubr.f32.gmra.mrb[0].mxu0 %v248
        %v493 = vpop.f32.mrb[0].mxu0
        %v494 = vadd.f32 0.0, %v493
        %v495 = vpop.f32.mrb[0].mxu0
        %v496 = vadd.f32 0.0, %v495
        %497 = vmatprep.mubr.f32.mxu0 %v253
        %498 = vmatmul.mubr.f32.gmra.mrb[0].mxu0 %v252
        %v499 = vpop.f32.mrb[0].mxu0
        %v500 = vadd.f32 0.0, %v499
        %v501 = vpop.f32.mrb[0].mxu0
        %v502 = vadd.f32 0.0, %v501
        %503 = vmatprep.mubr.f32.mxu0 %v257
        %504 = vmatmul.mubr.f32.gmra.mrb[0].mxu0 %v256
        %v505 = vpop.f32.mrb[0].mxu0
        %v506 = vadd.f32 0.0, %v505
        %v507 = vpop.f32.mrb[0].mxu0
        %v508 = vadd.f32 0.0, %v507
        %509 = vdwg.mxu0
        %510 = vmatprep.subr.mxu0 %v272
        %511 = vmatpush1.xpose.msra.mxu0 %v271
        %512 = vmatprep.subr.mxu0 %v276
        %513 = vmatpush1.xpose.msra.mxu0 %v275
        %514 = vmatprep.subr.mxu0 %v280
        %515 = vmatpush1.xpose.msra.mxu0 %v279
        %516 = vmatprep.subr.mxu0 %v284
        %517 = vmatpush1.xpose.msra.mxu0 %v283
        %518 = vmatprep.subr.mxu0 %v288
        %519 = vmatpush1.xpose.msra.mxu0 %v287
        %520 = vmatprep.subr.mxu0 %v292
        %521 = vmatpush1.xpose.msra.mxu0 %v291
        %522 = vmatprep.subr.mxu0 %v296
        %523 = vmatpush1.xpose.msra.mxu0 %v295
        %524 = vmatprep.subr.mxu0 %v300
        %525 = vmatpush1.xpose.msra.mxu0 %v299
        %526 = vmatprep.subr.mxu0 %v304
        %527 = vmatpush1.xpose.msra.mxu0 %v303
        %528 = vmatprep.subr.mxu0 %v308
        %529 = vmatpush1.xpose.msra.mxu0 %v307
        %530 = vmatprep.subr.mxu0 %v312
        %531 = vmatpush1.xpose.msra.mxu0 %v311
        %532 = vmatprep.subr.mxu0 %v316
        %533 = vmatpush1.xpose.msra.mxu0 %v315
        %534 = vmatprep.subr.mxu0 %v320
        %535 = vmatpush1.xpose.msra.mxu0 %v319
        %536 = vmatprep.subr.mxu0 %v324
        %537 = vmatpush1.xpose.msra.mxu0 %v323
        %538 = vmatprep.subr.mxu0 %v328
        %539 = vmatpush1.xpose.msra.mxu0 %v327
        %540 = vmatprep.subr.mxu0 %v332
        %541 = vmatpush1.xpose.msra.mxu0 %v331
        %542 = vmatprep.subr.mxu0 %v336
        %543 = vmatpush1.xpose.msra.mxu0 %v335
        %544 = vmatprep.subr.mxu0 %v340
        %545 = vmatpush1.xpose.msra.mxu0 %v339
        %546 = vmatprep.subr.mxu0 %v344
        %547 = vmatpush1.xpose.msra.mxu0 %v343
        %548 = vmatprep.subr.mxu0 %v348
        %549 = vmatpush1.xpose.msra.mxu0 %v347
        %550 = vmatprep.subr.mxu0 %v352
        %551 = vmatpush1.xpose.msra.mxu0 %v351
        %552 = vmatprep.subr.mxu0 %v356
        %553 = vmatpush1.xpose.msra.mxu0 %v355
        %554 = vmatprep.subr.mxu0 %v360
        %555 = vmatpush1.xpose.msra.mxu0 %v359
        %556 = vmatprep.subr.mxu0 %v364
        %557 = vmatpush1.xpose.msra.mxu0 %v363
        %558 = vmatprep.subr.mxu0 %v368
        %559 = vmatpush1.xpose.msra.mxu0 %v367
        %560 = vmatprep.subr.mxu0 %v372
        %561 = vmatpush1.xpose.msra.mxu0 %v371
        %562 = vmatprep.subr.mxu0 %v376
        %563 = vmatpush1.xpose.msra.mxu0 %v375
        %564 = vmatprep.subr.mxu0 %v380
        %565 = vmatpush1.xpose.msra.mxu0 %v379
        %566 = vmatprep.subr.mxu0 %v384
        %567 = vmatpush1.xpose.msra.mxu0 %v383
        %568 = vmatprep.subr.mxu0 %v388
        %569 = vmatpush1.xpose.msra.mxu0 %v387
        %570 = vmatprep.subr.mxu0 %v392
        %571 = vmatpush1.xpose.msra.mxu0 %v391
        %572 = vmatprep.subr.mxu0 %v396
        %573 = vmatpush1.xpose.msra.mxu0 %v395
        %574 = vmatprep.mubr.f32.mxu0 %v231
        %575 = vmatmul.mubr.f32.gmra.mrb[0].mxu0 %v230
        %v576 = vpop.f32.mrb[0].mxu0
        %v577 = vadd.f32 %v464, %v576
        %v578 = vpop.f32.mrb[0].mxu0
        %v579 = vadd.f32 %v466, %v578
        %580 = vmatprep.mubr.f32.mxu0 %v235
        %581 = vmatmul.mubr.f32.gmra.mrb[0].mxu0 %v234
        %v582 = vpop.f32.mrb[0].mxu0
        %v583 = vadd.f32 %v470, %v582
        %v584 = vpop.f32.mrb[0].mxu0
        %v585 = vadd.f32 %v472, %v584
        %586 = vmatprep.mubr.f32.mxu0 %v239
        %587 = vmatmul.mubr.f32.gmra.mrb[0].mxu0 %v238
        %v588 = vpop.f32.mrb[0].mxu0
        %v589 = vadd.f32 %v476, %v588
        %v590 = vpop.f32.mrb[0].mxu0
        %v591 = vadd.f32 %v478, %v590
        %592 = vmatprep.mubr.f32.mxu0 %v243
        %593 = vmatmul.mubr.f32.gmra.mrb[0].mxu0 %v242
        %v594 = vpop.f32.mrb[0].mxu0
        %v595 = vadd.f32 %v482, %v594
        %v596 = vpop.f32.mrb[0].mxu0
        %v597 = vadd.f32 %v484, %v596
        %598 = vmatprep.mubr.f32.mxu0 %v247
        %599 = vmatmul.mubr.f32.gmra.mrb[0].mxu0 %v246
        %v600 = vpop.f32.mrb[0].mxu0
        %v601 = vadd.f32 %v488, %v600
        %v602 = vpop.f32.mrb[0].mxu0
        %v603 = vadd.f32 %v490, %v602
        %604 = vmatprep.mubr.f32.mxu0 %v251
        %605 = vmatmul.mubr.f32.gmra.mrb[0].mxu0 %v250
        %v606 = vpop.f32.mrb[0].mxu0
        %v607 = vadd.f32 %v494, %v606
        %v608 = vpop.f32.mrb[0].mxu0
        %v609 = vadd.f32 %v496, %v608
        %610 = vmatprep.mubr.f32.mxu0 %v255
        %611 = vmatmul.mubr.f32.gmra.mrb[0].mxu0 %v254
        %v612 = vpop.f32.mrb[0].mxu0
        %v613 = vadd.f32 %v500, %v612
        %v614 = vpop.f32.mrb[0].mxu0
        %v615 = vadd.f32 %v502, %v614
        %616 = vmatprep.mubr.f32.mxu0 %v259
        %617 = vmatmul.mubr.f32.gmra.mrb[0].mxu0 %v258
        %v618 = vpop.f32.mrb[0].mxu0
        %v619 = vadd.f32 %v506, %v618
        %v620 = vpop.f32.mrb[0].mxu0
        %v621 = vadd.f32 %v508, %v620
        %622 = vdwg.mxu0
        %v623 = vmax.f32 %v577, -1.0
        %v624 = vmax.f32 %v579, -1.0
        %v625 = vmax.f32 %v583, -1.0
        %v626 = vmax.f32 %v585, -1.0
        %v627 = vmax.f32 %v589, -1.0
        %v628 = vmax.f32 %v591, -1.0
        %v629 = vmax.f32 %v595, -1.0
        %v630 = vmax.f32 %v597, -1.0
        %v631 = vmax.f32 %v601, -1.0
        %v632 = vmax.f32 %v603, -1.0
        %v633 = vmax.f32 %v607, -1.0
        %v634 = vmax.f32 %v609, -1.0
        %v635 = vmax.f32 %v613, -1.0
        %v636 = vmax.f32 %v615, -1.0
        %v637 = vmax.f32 %v619, -1.0
        %v638 = vmax.f32 %v621, -1.0
        %v639 = vmin.f32 %v623, 1.0
        %v640 = vmin.f32 %v624, 1.0
        %v641 = vmin.f32 %v625, 1.0
        %v642 = vmin.f32 %v626, 1.0
        %v643 = vmin.f32 %v627, 1.0
        %v644 = vmin.f32 %v628, 1.0
        %v645 = vmin.f32 %v629, 1.0
        %v646 = vmin.f32 %v630, 1.0
        %v647 = vmin.f32 %v631, 1.0
        %v648 = vmin.f32 %v632, 1.0
        %v649 = vmin.f32 %v633, 1.0
        %v650 = vmin.f32 %v634, 1.0
        %v651 = vmin.f32 %v635, 1.0
        %v652 = vmin.f32 %v636, 1.0
        %v653 = vmin.f32 %v637, 1.0
        %v654 = vmin.f32 %v638, 1.0
        %v655 = vmul.f32 %v639, %v639
        %v656 = vmul.f32 %v640, %v640
        %v657 = vmul.f32 %v641, %v641
        %v658 = vmul.f32 %v642, %v642
        %v659 = vmul.f32 %v643, %v643
        %v660 = vmul.f32 %v644, %v644
        %v661 = vmul.f32 %v645, %v645
        %v662 = vmul.f32 %v646, %v646
        %v663 = vmul.f32 %v647, %v647
        %v664 = vmul.f32 %v648, %v648
        %v665 = vmul.f32 %v649, %v649
        %v666 = vmul.f32 %v650, %v650
        %v667 = vmul.f32 %v651, %v651
        %v668 = vmul.f32 %v652, %v652
        %v669 = vmul.f32 %v653, %v653
        %v670 = vmul.f32 %v654, %v654
        %v671 = vsub.f32 1.0, %v655
        %v672 = vsub.f32 1.0, %v656
        %v673 = vsub.f32 1.0, %v657
        %v674 = vsub.f32 1.0, %v658
        %v675 = vsub.f32 1.0, %v659
        %v676 = vsub.f32 1.0, %v660
        %v677 = vsub.f32 1.0, %v661
        %v678 = vsub.f32 1.0, %v662
        %v679 = vsub.f32 1.0, %v663
        %v680 = vsub.f32 1.0, %v664
        %v681 = vsub.f32 1.0, %v665
        %v682 = vsub.f32 1.0, %v666
        %v683 = vsub.f32 1.0, %v667
        %v684 = vsub.f32 1.0, %v668
        %v685 = vsub.f32 1.0, %v669
        %v686 = vsub.f32 1.0, %v670
        %v687 = vmax.f32 %v671, 0.0
        %v688 = vmax.f32 %v672, 0.0
        %v689 = vmax.f32 %v673, 0.0
        %v690 = vmax.f32 %v674, 0.0
        %v691 = vmax.f32 %v675, 0.0
        %v692 = vmax.f32 %v676, 0.0
        %v693 = vmax.f32 %v677, 0.0
        %v694 = vmax.f32 %v678, 0.0
        %v695 = vmax.f32 %v679, 0.0
        %v696 = vmax.f32 %v680, 0.0
        %v697 = vmax.f32 %v681, 0.0
        %v698 = vmax.f32 %v682, 0.0
        %v699 = vmax.f32 %v683, 0.0
        %v700 = vmax.f32 %v684, 0.0
        %v701 = vmax.f32 %v685, 0.0
        %v702 = vmax.f32 %v686, 0.0
        %v703 = vrsqrt.pop %v687
        %v704 = vmul.f32 %v687, %v703
        %vm705 = vcmp.eq.f32.partialorder %v687, inf
        %v706 = vsel %vm705, %v687, %v704
        %vm707 = vcmp.eq.f32.partialorder %v687, 0.0
        %v708 = vand.u32 %v687, 2147483648
        %v709 = vsel %vm707, %v708, %v706
        %v710 = vrsqrt.pop %v688
        %v711 = vmul.f32 %v688, %v710
        %vm712 = vcmp.eq.f32.partialorder %v688, inf
        %v713 = vsel %vm712, %v688, %v711
        %vm714 = vcmp.eq.f32.partialorder %v688, 0.0
        %v715 = vand.u32 %v688, 2147483648
        %v716 = vsel %vm714, %v715, %v713
        %v717 = vrsqrt.pop %v689
        %v718 = vmul.f32 %v689, %v717
        %vm719 = vcmp.eq.f32.partialorder %v689, inf
        %v720 = vsel %vm719, %v689, %v718
        %vm721 = vcmp.eq.f32.partialorder %v689, 0.0
        %v722 = vand.u32 %v689, 2147483648
        %v723 = vsel %vm721, %v722, %v720
        %v724 = vrsqrt.pop %v690
        %v725 = vmul.f32 %v690, %v724
        %vm726 = vcmp.eq.f32.partialorder %v690, inf
        %v727 = vsel %vm726, %v690, %v725
        %vm728 = vcmp.eq.f32.partialorder %v690, 0.0
        %v729 = vand.u32 %v690, 2147483648
        %v730 = vsel %vm728, %v729, %v727
        %v731 = vrsqrt.pop %v691
        %v732 = vmul.f32 %v691, %v731
        %vm733 = vcmp.eq.f32.partialorder %v691, inf
        %v734 = vsel %vm733, %v691, %v732
        %vm735 = vcmp.eq.f32.partialorder %v691, 0.0
        %v736 = vand.u32 %v691, 2147483648
        %v737 = vsel %vm735, %v736, %v734
        %v738 = vrsqrt.pop %v692
        %v739 = vmul.f32 %v692, %v738
        %vm740 = vcmp.eq.f32.partialorder %v692, inf
        %v741 = vsel %vm740, %v692, %v739
        %vm742 = vcmp.eq.f32.partialorder %v692, 0.0
        %v743 = vand.u32 %v692, 2147483648
        %v744 = vsel %vm742, %v743, %v741
        %v745 = vrsqrt.pop %v693
        %v746 = vmul.f32 %v693, %v745
        %vm747 = vcmp.eq.f32.partialorder %v693, inf
        %v748 = vsel %vm747, %v693, %v746
        %vm749 = vcmp.eq.f32.partialorder %v693, 0.0
        %v750 = vand.u32 %v693, 2147483648
        %v751 = vsel %vm749, %v750, %v748
        %v752 = vrsqrt.pop %v694
        %v753 = vmul.f32 %v694, %v752
        %vm754 = vcmp.eq.f32.partialorder %v694, inf
        %v755 = vsel %vm754, %v694, %v753
        %vm756 = vcmp.eq.f32.partialorder %v694, 0.0
        %v757 = vand.u32 %v694, 2147483648
        %v758 = vsel %vm756, %v757, %v755
        %v759 = vrsqrt.pop %v695
        %v760 = vmul.f32 %v695, %v759
        %vm761 = vcmp.eq.f32.partialorder %v695, inf
        %v762 = vsel %vm761, %v695, %v760
        %vm763 = vcmp.eq.f32.partialorder %v695, 0.0
        %v764 = vand.u32 %v695, 2147483648
        %v765 = vsel %vm763, %v764, %v762
        %v766 = vrsqrt.pop %v696
        %v767 = vmul.f32 %v696, %v766
        %vm768 = vcmp.eq.f32.partialorder %v696, inf
        %v769 = vsel %vm768, %v696, %v767
        %vm770 = vcmp.eq.f32.partialorder %v696, 0.0
        %v771 = vand.u32 %v696, 2147483648
        %v772 = vsel %vm770, %v771, %v769
        %v773 = vrsqrt.pop %v697
        %v774 = vmul.f32 %v697, %v773
        %vm775 = vcmp.eq.f32.partialorder %v697, inf
        %v776 = vsel %vm775, %v697, %v774
        %vm777 = vcmp.eq.f32.partialorder %v697, 0.0
        %v778 = vand.u32 %v697, 2147483648
        %v779 = vsel %vm777, %v778, %v776
        %v780 = vrsqrt.pop %v698
        %v781 = vmul.f32 %v698, %v780
        %vm782 = vcmp.eq.f32.partialorder %v698, inf
        %v783 = vsel %vm782, %v698, %v781
        %vm784 = vcmp.eq.f32.partialorder %v698, 0.0
        %v785 = vand.u32 %v698, 2147483648
        %v786 = vsel %vm784, %v785, %v783
        %v787 = vrsqrt.pop %v699
        %v788 = vmul.f32 %v699, %v787
        %vm789 = vcmp.eq.f32.partialorder %v699, inf
        %v790 = vsel %vm789, %v699, %v788
        %vm791 = vcmp.eq.f32.partialorder %v699, 0.0
        %v792 = vand.u32 %v699, 2147483648
        %v793 = vsel %vm791, %v792, %v790
        %v794 = vrsqrt.pop %v700
        %v795 = vmul.f32 %v700, %v794
        %vm796 = vcmp.eq.f32.partialorder %v700, inf
        %v797 = vsel %vm796, %v700, %v795
        %vm798 = vcmp.eq.f32.partialorder %v700, 0.0
        %v799 = vand.u32 %v700, 2147483648
        %v800 = vsel %vm798, %v799, %v797
        %v801 = vrsqrt.pop %v701
        %v802 = vmul.f32 %v701, %v801
        %vm803 = vcmp.eq.f32.partialorder %v701, inf
        %v804 = vsel %vm803, %v701, %v802
        %vm805 = vcmp.eq.f32.partialorder %v701, 0.0
        %v806 = vand.u32 %v701, 2147483648
        %v807 = vsel %vm805, %v806, %v804
        %v808 = vrsqrt.pop %v702
        %v809 = vmul.f32 %v702, %v808
        %vm810 = vcmp.eq.f32.partialorder %v702, inf
        %v811 = vsel %vm810, %v702, %v809
        %vm812 = vcmp.eq.f32.partialorder %v702, 0.0
        %v813 = vand.u32 %v702, 2147483648
        %v814 = vsel %vm812, %v813, %v811
        %v815 = vmul.f32 %v639, 30.0
        %v816 = vmul.f32 %v640, 30.0
        %v817 = vmul.f32 %v641, 30.0
        %v818 = vmul.f32 %v642, 30.0
        %v819 = vmul.f32 %v643, 30.0
        %v820 = vmul.f32 %v644, 30.0
        %v821 = vmul.f32 %v645, 30.0
        %v822 = vmul.f32 %v646, 30.0
        %v823 = vmul.f32 %v647, 30.0
        %v824 = vmul.f32 %v648, 30.0
        %v825 = vmul.f32 %v649, 30.0
        %v826 = vmul.f32 %v650, 30.0
        %v827 = vmul.f32 %v651, 30.0
        %v828 = vmul.f32 %v652, 30.0
        %v829 = vmul.f32 %v653, 30.0
        %v830 = vmul.f32 %v654, 30.0
        %v831 = vmul.f32 %v639, 26.327477
        %v832 = vmul.f32 %v640, 26.327477
        %v833 = vmul.f32 %v641, 26.327477
        %v834 = vmul.f32 %v642, 26.327477
        %v835 = vmul.f32 %v643, 26.327477
        %v836 = vmul.f32 %v644, 26.327477
        %v837 = vmul.f32 %v645, 26.327477
        %v838 = vmul.f32 %v646, 26.327477
        %v839 = vmul.f32 %v647, 26.327477
        %v840 = vmul.f32 %v648, 26.327477
        %v841 = vmul.f32 %v649, 26.327477
        %v842 = vmul.f32 %v650, 26.327477
        %v843 = vmul.f32 %v651, 26.327477
        %v844 = vmul.f32 %v652, 26.327477
        %v845 = vmul.f32 %v653, 26.327477
        %v846 = vmul.f32 %v654, 26.327477
        %v847 = vmul.f32 %v709, 14.382766
        %v848 = vmul.f32 %v716, 14.382766
        %v849 = vmul.f32 %v723, 14.382766
        %v850 = vmul.f32 %v730, 14.382766
        %v851 = vmul.f32 %v737, 14.382766
        %v852 = vmul.f32 %v744, 14.382766
        %v853 = vmul.f32 %v751, 14.382766
        %v854 = vmul.f32 %v758, 14.382766
        %v855 = vmul.f32 %v765, 14.382766
        %v856 = vmul.f32 %v772, 14.382766
        %v857 = vmul.f32 %v779, 14.382766
        %v858 = vmul.f32 %v786, 14.382766
        %v859 = vmul.f32 %v793, 14.382766
        %v860 = vmul.f32 %v800, 14.382766
        %v861 = vmul.f32 %v807, 14.382766
        %v862 = vmul.f32 %v814, 14.382766
        %v863 = vsub.f32 %v831, %v847
        %v864 = vsub.f32 %v832, %v848
        %v865 = vsub.f32 %v833, %v849
        %v866 = vsub.f32 %v834, %v850
        %v867 = vsub.f32 %v835, %v851
        %v868 = vsub.f32 %v836, %v852
        %v869 = vsub.f32 %v837, %v853
        %v870 = vsub.f32 %v838, %v854
        %v871 = vsub.f32 %v839, %v855
        %v872 = vsub.f32 %v840, %v856
        %v873 = vsub.f32 %v841, %v857
        %v874 = vsub.f32 %v842, %v858
        %v875 = vsub.f32 %v843, %v859
        %v876 = vsub.f32 %v844, %v860
        %v877 = vsub.f32 %v845, %v861
        %v878 = vsub.f32 %v846, %v862
        %v879 = vlaneseq
        %v880 = vand.u32 %v879, 127
        %v881 = vadd.s32 %v880, 128
        %s882 = smul.u32 %s25, 256
        %v883 = vstv %s882
        %v884 = vsub.s32 %v261, %v883
        %v885 = vsub.s32 %v262, %v883
        %v886 = vsub.s32 %v263, %v883
        %v887 = vsub.s32 %v264, %v883
        %v888 = vsub.s32 %v265, %v883
        %v889 = vsub.s32 %v266, %v883
        %v890 = vsub.s32 %v267, %v883
        %v891 = vsub.s32 %v268, %v883
        %892 = vset.pattern.permute.xlu0 0
        %893 = vperm.xlu0 %892, %v884
        %v894 = vpop.permute.xlu0 %893
        %895 = vset.pattern.permute.xlu0 0
        %896 = vperm.xlu0 %895, %v885
        %v897 = vpop.permute.xlu0 %896
        %898 = vset.pattern.permute.xlu0 0
        %899 = vperm.xlu0 %898, %v886
        %v900 = vpop.permute.xlu0 %899
        %901 = vset.pattern.permute.xlu0 0
        %902 = vperm.xlu0 %901, %v887
        %v903 = vpop.permute.xlu0 %902
        %904 = vset.pattern.permute.xlu0 0
        %905 = vperm.xlu0 %904, %v888
        %v906 = vpop.permute.xlu0 %905
        %907 = vset.pattern.permute.xlu0 0
        %908 = vperm.xlu0 %907, %v889
        %v909 = vpop.permute.xlu0 %908
        %910 = vset.pattern.permute.xlu0 0
        %911 = vperm.xlu0 %910, %v890
        %v912 = vpop.permute.xlu0 %911
        %913 = vset.pattern.permute.xlu0 0
        %914 = vperm.xlu0 %913, %v891
        %v915 = vpop.permute.xlu0 %914
        %vm916 = vcmp.eq.s32.totalorder %v880, %v894
        %vm917 = vcmp.eq.s32.totalorder %v881, %v894
        %vm918 = vcmp.eq.s32.totalorder %v880, %v897
        %vm919 = vcmp.eq.s32.totalorder %v881, %v897
        %vm920 = vcmp.eq.s32.totalorder %v880, %v900
        %vm921 = vcmp.eq.s32.totalorder %v881, %v900
        %vm922 = vcmp.eq.s32.totalorder %v880, %v903
        %vm923 = vcmp.eq.s32.totalorder %v881, %v903
        %vm924 = vcmp.eq.s32.totalorder %v880, %v906
        %vm925 = vcmp.eq.s32.totalorder %v881, %v906
        %vm926 = vcmp.eq.s32.totalorder %v880, %v909
        %vm927 = vcmp.eq.s32.totalorder %v881, %v909
        %vm928 = vcmp.eq.s32.totalorder %v880, %v912
        %vm929 = vcmp.eq.s32.totalorder %v881, %v912
        %vm930 = vcmp.eq.s32.totalorder %v880, %v915
        %vm931 = vcmp.eq.s32.totalorder %v881, %v915
        %v932 = vsel %vm916, %v863, %v815
        %v933 = vsel %vm917, %v864, %v816
        %v934 = vsel %vm918, %v865, %v817
        %v935 = vsel %vm919, %v866, %v818
        %v936 = vsel %vm920, %v867, %v819
        %v937 = vsel %vm921, %v868, %v820
        %v938 = vsel %vm922, %v869, %v821
        %v939 = vsel %vm923, %v870, %v822
        %v940 = vsel %vm924, %v871, %v823
        %v941 = vsel %vm925, %v872, %v824
        %v942 = vsel %vm926, %v873, %v825
        %v943 = vsel %vm927, %v874, %v826
        %v944 = vsel %vm928, %v875, %v827
        %v945 = vsel %vm929, %v876, %v828
        %v946 = vsel %vm930, %v877, %v829
        %v947 = vsel %vm931, %v878, %v830
        %948 = vst [vmem:[%s218] sm:$0xff] %v932
        %949 = vst [vmem:[%s218 + $0x8] sm:$0xff] %v933
        %950 = vst [vmem:[%s218 + $0x10] sm:$0xff] %v934
        %951 = vst [vmem:[%s218 + $0x18] sm:$0xff] %v935
        %952 = vst [vmem:[%s218 + $0x20] sm:$0xff] %v936
        %953 = vst [vmem:[%s218 + $0x28] sm:$0xff] %v937
        %954 = vst [vmem:[%s218 + $0x30] sm:$0xff] %v938
        %955 = vst [vmem:[%s218 + $0x38] sm:$0xff] %v939
        %956 = vst [vmem:[%s218 + $0x40] sm:$0xff] %v940
        %957 = vst [vmem:[%s218 + $0x48] sm:$0xff] %v941
        %958 = vst [vmem:[%s218 + $0x50] sm:$0xff] %v942
        %959 = vst [vmem:[%s218 + $0x58] sm:$0xff] %v943
        %960 = vst [vmem:[%s218 + $0x60] sm:$0xff] %v944
        %961 = vst [vmem:[%s218 + $0x68] sm:$0xff] %v945
        %962 = vst [vmem:[%s218 + $0x70] sm:$0xff] %v946
        %963 = vst [vmem:[%s218 + $0x78] sm:$0xff] %v947
        %s964 = sand.u32 %s111, 1
        %s965 = scalar_lea.sflag [#allocation4], %s964
        %s966 = sand.u32 %s111, 1
        %s967 = smul.addr %s966, 128
        %s968 = scalar_lea.vmem [#allocation7], %s967
        // Predicated region
        $region41: #{tpu_custom_call.1} parent=31 // pred_check
          %p969 = pneg %p121
        $region42: #{tpu_custom_call.1} parent=31 // pred_check_branch
          %971 = sbr.rel (%p969) target = $region44
        $region43: #{tpu_custom_call.1} parent=31 // pred_region
          %s972 = smul.u32 8, %s26
          %s973 = smul.u32 2, %s25
          %s975 = ssub.s32 2048, 2048
          %976 = vsyncadd %s965, %s975
          %s977 = smul.addr %s972, 8
          %s978 = sadd.s32 %s973, %s977
          %s979 = smul.addr %s978, 128
          %s980 = scalar_lea.hbm %s3, %s979
          %s981 = sshll.u32 %s968, 4
          %s982 = int_to_ptr.vmem [resolvable:$true] %s981
          %987 = dma.vmem_to_hbm [thread:$0]  %s982, 2048, %s980, %s965, 256, 1024, 16
        $region44: #{tpu_custom_call.1} parent=31 // pred_fallthru
          _
      $region32: #{tpu_custom_call.1} parent=5 // pred_fallthru
        _
      %p988 = scmp.le.s32.totalorder 2, %s16
      // Predicated region
      $region45: #{tpu_custom_call.1} parent=5 // pred_check
        %p989 = pneg %p988
      $region46: #{tpu_custom_call.1} parent=5 // pred_check_branch
        %991 = sbr.rel (%p989) target = $region48
      $region47: #{tpu_custom_call.1} parent=5 // pred_region
        %s992 = ssub.s32 %s16, 2
        // Predicated region
        $region49: #{tpu_custom_call.1} parent=47 // pred_check
          %p993 = pneg %p127
        $region50: #{tpu_custom_call.1} parent=47 // pred_check_branch
          %995 = sbr.rel (%p993) target = $region52
        $region51: #{tpu_custom_call.1} parent=47 // pred_region
          %s996 = sand.u32 %s112, 1
          %s997 = scalar_lea.sflag [#allocation4], %s996
          %s998 = sand.u32 %s112, 1
          %s999 = smul.addr %s998, 128
          %s1000 = scalar_lea.vmem [#allocation7], %s999
          %1001 = dma.done %s997, 2048
        $region52: #{tpu_custom_call.1} parent=47 // pred_fallthru
          _
      $region48: #{tpu_custom_call.1} parent=5 // pred_fallthru
        _
    $region6: #{tpu_custom_call.1} parent=1 // loop_footer
      %s20 = sadd.s32 1, %s16
    $region7: #{tpu_custom_call.1} parent=1 // loop_footer_branch
      %15 = sbr.rel target = $region3
    $region8: #{tpu_custom_call.1} parent=1 // loop_exit
      _
    %1002 = vsyncpa [#allocation3], 1
    %s1003 = scalar_lea.sflag [#allocation3], 1
    %1004 = vsyncpa %s1003, 1
    %1005 = vsyncpa [#allocation6], 1
    %s1006 = scalar_lea.sflag [#allocation6], 1
    %1007 = vsyncpa %s1006, 1
    %1008 = vsyncpa [#allocation4], 1
    %s1009 = scalar_lea.sflag [#allocation4], 1
    %1010 = vsyncpa %s1009, 1

</llo_original>
